<compile_context>
chip_gen: v7x
topology: tpu7x:2x2x1
jax: 0.10.0
libtpu: 0.0.40
codegen_flags: <defaults>
</compile_context>

<pallas_src>
import functools

import jax
import jax.numpy as jnp
import numpy as np
from jax.experimental import pallas as pl
from jax.experimental.pallas import tpu as pltpu


# ----------------------------------------------------------------------------
# Helpers
# ----------------------------------------------------------------------------
def _round_up(v, m):
    return (v + m - 1) // m * m


def _rep_spec(a):
    nd = a.ndim
    return pl.BlockSpec(a.shape, lambda n, _nd=nd: (0,) * _nd)


@functools.lru_cache(maxsize=None)
def _roll_shift_sign():
    """Pin down pltpu.roll's rotation direction with a one-time tiny probe.

    Returns +1 if pltpu.roll(x, a, axis)[..., i] == x[..., (i - a) % n]
    (numpy convention), -1 for the opposite direction.  The conv tap shifts
    are derived from this sign so the kernel always gathers src[p + s].
    """
    def probe(x_ref, o_ref):
        o_ref[...] = pltpu.roll(x_ref[...], 1, axis=1)

    with jax.ensure_compile_time_eval():
        x = jax.lax.broadcasted_iota(jnp.float32, (8, 128), 1)
        y = pl.pallas_call(
            probe, out_shape=jax.ShapeDtypeStruct((8, 128), jnp.float32))(x)
        val = int(np.asarray(y)[0, 0])
    assert val in (127, 1), f"unexpected pltpu.roll probe result: {val}"
    return 1 if val == 127 else -1


# ----------------------------------------------------------------------------
# Fused Tree kernel (flipped, lane-dense layout: channels x flat-padded-space)
# ----------------------------------------------------------------------------
def _tree_kernel(
    x_ref,             # (1, CinP, LANES) zero-padded flattened input image
    mask_ref,          # (1, LANES)       1.0 at interior pixels, 0.0 on the halo
    wl1_ref, bl1_ref,  # left.conv1  : (Cout, 9*CinP), (Cout, 1)
    wl2_ref, bl2_ref,  # left.conv2  : (Cout, 9*Cout), (Cout, 1)
    wls_ref, bls_ref,  # left.shortcut 1x1 : (Cout, CinP), (Cout, 1)
    wr1_ref, br1_ref,  # right.conv1 : (Cout, 9*Cout), (Cout, 1)
    wr2_ref, br2_ref,  # right.conv2 : (Cout, 9*Cout), (Cout, 1)
    wra_ref, wrb_ref, brt_ref,   # root 1x1 weight split for [out1, out2] + bias
    out_ref,           # (1, Cout, LANES)
    *, roll_amts):
    x = x_ref[0]                 # (CinP, LANES)  spatial on lanes (dense)
    mask = mask_ref[...]         # (1, LANES)

    def conv3x3(src, w_ref):
        # Gather all 9 taps into one (9*C, LANES) slab via XLU lane rotations
        # and issue a single MXU matmul (K = 9*C) -- no im2col, no 9-dot chain.
        taps = jnp.concatenate(
            [src if a == 0 else pltpu.roll(src, a, axis=1) for a in roll_amts],
            axis=0)
        return jnp.dot(w_ref[...], taps, preferred_element_type=jnp.float32)

    # ---- left BasicBlock: relu(bn2(conv2(relu(bn1(conv1(x))))) + proj(x))
    h = jnp.maximum(conv3x3(x, wl1_ref) + bl1_ref[...], 0.0) * mask
    pre = conv3x3(h, wl2_ref) + bl2_ref[...]
    sc = jnp.dot(wls_ref[...], x,
                 preferred_element_type=jnp.float32) + bls_ref[...]
    o1 = jnp.maximum(pre + sc, 0.0) * mask

    # ---- right BasicBlock (identity shortcut). o2 needs no halo mask: it
    # never feeds another 3x3 conv and halo pixels are sliced off outside.
    h2 = jnp.maximum(conv3x3(o1, wr1_ref) + br1_ref[...], 0.0) * mask
    o2 = jnp.maximum(conv3x3(h2, wr2_ref) + br2_ref[...] + o1, 0.0)

    # ---- Root: relu(bn(conv1x1(cat([out1, out2], ch)))) -- concat fused away.
    root = (jnp.dot(wra_ref[...], o1, preferred_element_type=jnp.float32)
            + jnp.dot(wrb_ref[...], o2, preferred_element_type=jnp.float32))
    out_ref[0] = jnp.maximum(root + brt_ref[...], 0.0)


# ----------------------------------------------------------------------------
# BN folding into the flipped weight layout
# ----------------------------------------------------------------------------
def _fold_conv_bn(q, cin_pad=None):
    """Fold eval-mode BN into the conv weight/bias in (Cout, taps*Cin) layout."""
    w = q["w"]                                    # (Cout, Cin, k, k)
    cout, cin = w.shape[0], w.shape[1]
    scale = q["gamma"] / jnp.sqrt(q["var"] + q["eps"])
    bias = (q["beta"] - scale * q["mean"]).reshape(cout, 1)
    if cin_pad is not None and cin_pad > cin:
        w = jnp.pad(w, ((0, 0), (0, cin_pad - cin), (0, 0), (0, 0)))
    # rows of the tap slab are ordered (tap k = dy*3+dx, input channel)
    w_f = jnp.transpose(w, (0, 2, 3, 1)).reshape(cout, -1) * scale[:, None]
    return w_f, bias


# ----------------------------------------------------------------------------
# Wrapper
# ----------------------------------------------------------------------------
def tree_forward(x_nchw, params):
    """Fused Pallas forward for Tree(BasicBlock, Cin, Cout, level=1, stride=1)."""
    N, Cin, H, W = x_nchw.shape
    Cout = params["root"]["w"].shape[0]

    W2, Hp = W + 2, H + 2
    P = Hp * W2                                 # flattened padded image size
    LANES = _round_up(P, 128)                   # lane-dense spatial axis
    CinP = _round_up(Cin, 8)                    # sublane-aligned channel count

    # NCHW is already the lane-dense layout: pad channels to 8, flatten the
    # zero-padded spatial extent onto the lane axis. No transposes anywhere.
    xp = jnp.pad(x_nchw, ((0, 0), (0, CinP - Cin), (1, 1), (1, 1)))
    xp = xp.reshape(N, CinP, P)
    xp = jnp.pad(xp, ((0, 0), (0, 0), (0, LANES - P)))

    # Interior mask (1.0 = real output pixel, 0.0 = halo ring / lane tail).
    p = np.arange(LANES)
    py, px = p // W2, p % W2
    mask = jnp.asarray(((px >= 1) & (px <= W) & (py >= 1) & (py <= H))
                       .astype(np.float32).reshape(1, LANES))

    # Fold eval-mode BN into flipped-layout conv weights / biases.
    lp, rp = params["left"], params["right"]
    wl1, bl1 = _fold_conv_bn(lp["conv1"], cin_pad=CinP)
    wl2, bl2 = _fold_conv_bn(lp["conv2"])
    wls, bls = _fold_conv_bn(lp["short"], cin_pad=CinP)
    wr1, br1 = _fold_conv_bn(rp["conv1"])
    wr2, br2 = _fold_conv_bn(rp["conv2"])
    wrt, brt = _fold_conv_bn(params["root"])
    wra, wrb = wrt[:, :Cout], wrt[:, Cout:]     # multiply out1 / out2 resp.

    weight_args = (wl1, bl1, wl2, bl2, wls, bls,
                   wr1, br1, wr2, br2, wra, wrb, brt)

    # Tap shifts in flattened padded-image coordinates; rotate so taps read
    # src[p + s] regardless of pltpu.roll's rotation convention.
    shifts = tuple((dy - 1) * W2 + (dx - 1) for dy in range(3) for dx in range(3))
    sign = _roll_shift_sign()
    roll_amts = tuple((-sign * s) % LANES for s in shifts)

    kernel = functools.partial(_tree_kernel, roll_amts=roll_amts)
    out_pf = pl.pallas_call(
        kernel,
        out_shape=jax.ShapeDtypeStruct((N, Cout, LANES), jnp.float32),
        grid_spec=pltpu.PrefetchScalarGridSpec(
            num_scalar_prefetch=0,
            grid=(N,),     # one image per step; 2 parallel steps feed both v7x TCs
            in_specs=[pl.BlockSpec((1, CinP, LANES), lambda n: (n, 0, 0)),
                      _rep_spec(mask)] + [_rep_spec(a) for a in weight_args],
            out_specs=pl.BlockSpec((1, Cout, LANES), lambda n: (n, 0, 0))),
        compiler_params=pltpu.CompilerParams(
            dimension_semantics=("parallel",)),
    )(xp, mask, *weight_args)

    # Drop the halo ring / lane tail; the result is already NCHW.
    out = out_pf[:, :, :P].reshape(N, Cout, Hp, W2)[:, :, 1:H + 1, 1:W + 1]
    return out


# ----------------------------------------------------------------------------
# Parameter construction (deterministic, raw conv + BN params)
# ----------------------------------------------------------------------------
def make_conv_bn(key, cin, cout, ksize):
    """Conv2d(cin, cout, ksize, bias=False) + BatchNorm2d(cout) raw params."""
    k_w, k_g, k_b = jax.random.split(key, 3)
    w = 0.1 * jax.random.normal(k_w, (cout, cin, ksize, ksize), jnp.float32)
    gamma = 1.0 + 0.1 * jax.random.normal(k_g, (cout,), jnp.float32)
    beta = 0.1 * jax.random.normal(k_b, (cout,), jnp.float32)
    mean = jnp.zeros((cout,), jnp.float32)      # fresh running stats
    var = jnp.ones((cout,), jnp.float32)
    # TODO(synk): a freshly constructed torch Tree defaults to train-mode BN
    # (batch statistics); we fold eval-mode running stats (inference path).
    return dict(w=w, gamma=gamma, beta=beta, mean=mean, var=var, eps=1e-5)


# ----------------------------------------------------------------------------
# Pure-JAX reference (lax conv) for numeric verification
# ----------------------------------------------------------------------------
def _bn_ref(y, q):
    return (y - q["mean"]) / jnp.sqrt(q["var"] + q["eps"]) * q["gamma"] + q["beta"]


def _conv_ref(x_nhwc, w_oihw, padding):
    w_hwio = jnp.transpose(w_oihw, (2, 3, 1, 0))
    return jax.lax.conv_general_dilated(
        x_nhwc, w_hwio, window_strides=(1, 1), padding=padding,
        dimension_numbers=("NHWC", "HWIO", "NHWC"))


def _basic_block_ref(x, bp):
    h = jnp.maximum(_bn_ref(_conv_ref(x, bp["conv1"]["w"], "SAME"), bp["conv1"]), 0.0)
    y = _bn_ref(_conv_ref(h, bp["conv2"]["w"], "SAME"), bp["conv2"])
    s = (_bn_ref(_conv_ref(x, bp["short"]["w"], "VALID"), bp["short"])
         if "short" in bp else x)
    return jnp.maximum(y + s, 0.0)


def tree_reference(x_nchw, params):
    x = jnp.transpose(x_nchw, (0, 2, 3, 1))
    o1 = _basic_block_ref(x, params["left"])
    o2 = _basic_block_ref(o1, params["right"])
    cat = jnp.concatenate([o1, o2], axis=-1)
    out = jnp.maximum(_bn_ref(_conv_ref(cat, params["root"]["w"], "VALID"),
                              params["root"]), 0.0)
    return jnp.transpose(out, (0, 3, 1, 2))


# ----------------------------------------------------------------------------
# Main
# ----------------------------------------------------------------------------
if __name__ == "__main__":
    # Tree(block=BasicBlock, in_channels=4, out_channels=8, level=1, stride=1)
    # TODO(synk): the spec does not pin `block`; we use the DLA BasicBlock
    # (conv3x3-BN-ReLU, conv3x3-BN, 1x1-conv-BN projection shortcut, ReLU),
    # which is the block Tree is instantiated with in the source model.
    in_channels, out_channels = 4, 8
    N, H, W = 2, 16, 16

    keys = jax.random.split(jax.random.PRNGKey(0), 7)
    params = {
        "left": {"conv1": make_conv_bn(keys[0], in_channels, out_channels, 3),
                 "conv2": make_conv_bn(keys[1], out_channels, out_channels, 3),
                 "short": make_conv_bn(keys[2], in_channels, out_channels, 1)},
        "right": {"conv1": make_conv_bn(keys[3], out_channels, out_channels, 3),
                  "conv2": make_conv_bn(keys[4], out_channels, out_channels, 3)},
        "root": make_conv_bn(keys[5], 2 * out_channels, out_channels, 1),
    }
    x = jax.random.normal(keys[6], (N, in_channels, H, W), jnp.float32)

    _roll_shift_sign()   # warm the one-time rotation-direction probe outside jit

    out = jax.block_until_ready(jax.jit(tree_forward)(x, params))
    assert out.shape == (N, out_channels, H, W), out.shape

    ref = jax.block_until_ready(tree_reference(x, params))
    np.testing.assert_allclose(np.asarray(out), np.asarray(ref),
                               rtol=1e-4, atol=1e-4)
    print("KERNEL_OK")
</pallas_src>

<mosaic_0001>
module attributes {stable_mosaic.version = 11 : i64} {
  func.func @probe(%arg0: memref<8x128xf32, #tpu.memory_space<vmem>>, %arg1: memref<8x128xf32, #tpu.memory_space<vmem>>) attributes {dimension_semantics = [], scalar_prefetch = 0 : i64, scratch_operands = 0 : i64, tpu.core_type = #tpu.core_type<tc>} {
    %c0 = arith.constant 0 : index
    %c0_0 = arith.constant 0 : index
    %0 = vector.load %arg0[%c0, %c0_0] : memref<8x128xf32, #tpu.memory_space<vmem>>, vector<8x128xf32>
    %c1_i32 = arith.constant 1 : i32
    %1 = tpu.dynamic_rotate %0 by %c1_i32 dim 1 : vector<8x128xf32>, i32 -> vector<8x128xf32>
    %c0_1 = arith.constant 0 : index
    %c0_2 = arith.constant 0 : index
    %2 = vector.load %arg1[%c0_1, %c0_2] : memref<8x128xf32, #tpu.memory_space<vmem>>, vector<8x128xf32>
    tpu.vector_store %arg1[%c0_1, %c0_2], %1 {strides = array<i32>} : memref<8x128xf32, #tpu.memory_space<vmem>>, vector<8x128xf32>,
    return
  }
}

</mosaic_0001>

<llo_original>
// kernel: tpu_custom_call.1
$region0: #{tpu_custom_call.1}
  #allocation0 [shape = 'u32[]', space=smem, size = 0x4, offset = 0x4, fixed_abs, tag = 'smem constant byte address 0x4 - core index']
  #allocation1 [shape = 'u32[144,128]{1,0:T(1,128)}', space=vmem, size = 0x12000, scoped, tag = 'internal scratch']
  %s0 = inlined_call_operand.hbm [shape: f32[8,128], index: 0, kind: input, shape index: {}]
  %s1 = inlined_call_operand.hbm [shape: f32[8,128], index: 1, kind: output, shape index: {}]
  %s2 = sld [smem:[#allocation0]]
  $region18: #{tpu_custom_call.1} parent=0
    _
  %s4 = ssub.s32 1, %s2
  %s5 = scalar_select 0, %s4, %s2
  $region1: #{tpu_custom_call.1} parent=0
    #allocation2 [shape = 'u8[4096]{0}', space=vmem, size = 0x1000, scoped, tag = 'input window, operand 0, single buffered']
    #allocation3 [shape = 's32[1]{0}', space=sflag, size = 0x4, scoped, tag = 'scoped memory for tpu_custom_call.1']
    #allocation4 [shape = 's32[1]{0}', space=sflag, size = 0x4, scoped, tag = 'scoped memory for tpu_custom_call.1']
    #allocation5 [shape = 'u8[4096]{0}', space=vmem, size = 0x1000, scoped, tag = 'output window, operand 0, single buffered']
    %6 = vsyncpa [#allocation3], 0
    %7 = vsyncpa [#allocation4], 0
    // Predicated region
    $region2: #{tpu_custom_call.1} parent=1 // pred_check
      _
    $region3: #{tpu_custom_call.1} parent=1 // pred_check_branch
      %9 = sbr.rel (0) target = $region5
    $region4: #{tpu_custom_call.1} parent=1 // pred_region
      %s11 = ssub.s32 128, 128
      %12 = vsyncadd [#allocation3], %s11
      %s14 = sshll.u32 [#allocation2], 4
      %s15 = int_to_ptr.vmem [resolvable:$true] %s14
      %17 = dma.hbm_to_vmem [thread:$0]  %s0, 128, %s15, [#allocation3]
    $region5: #{tpu_custom_call.1} parent=1 // pred_fallthru
      _
    // Predicated region
    $region6: #{tpu_custom_call.1} parent=1 // pred_check
      _
    $region7: #{tpu_custom_call.1} parent=1 // pred_check_branch
      %19 = sbr.rel (0) target = $region9
    $region8: #{tpu_custom_call.1} parent=1 // pred_region
      %20 = dma.done [#allocation3], 128
    $region9: #{tpu_custom_call.1} parent=1 // pred_fallthru
      _
    %v21 = vld [vmem:[#allocation2] sm:$0xff]
    %22 = vrot.lane.b32.xlu0 %v21, 1
    %v23 = vpop.permute.xlu0 %22
    %24 = vst [vmem:[#allocation5] sm:$0xff] %v23
    // Predicated region
    $region10: #{tpu_custom_call.1} parent=1 // pred_check
      _
    $region11: #{tpu_custom_call.1} parent=1 // pred_check_branch
      %26 = sbr.rel (0) target = $region13
    $region12: #{tpu_custom_call.1} parent=1 // pred_region
      %s28 = ssub.s32 128, 128
      %29 = vsyncadd [#allocation4], %s28
      %s31 = sshll.u32 [#allocation5], 4
      %s32 = int_to_ptr.vmem [resolvable:$true] %s31
      %34 = dma.vmem_to_hbm [thread:$0]  %s32, 128, %s1, [#allocation4]
    $region13: #{tpu_custom_call.1} parent=1 // pred_fallthru
      _
    // Predicated region
    $region14: #{tpu_custom_call.1} parent=1 // pred_check
      _
    $region15: #{tpu_custom_call.1} parent=1 // pred_check_branch
      %36 = sbr.rel (0) target = $region17
    $region16: #{tpu_custom_call.1} parent=1 // pred_region
      %37 = dma.done [#allocation4], 128
    $region17: #{tpu_custom_call.1} parent=1 // pred_fallthru
      _
    %38 = vsyncpa [#allocation3], 1
    %39 = vsyncpa [#allocation4], 1

</llo_original>
